<compile_context>
chip_gen: v7x
topology: tpu7x:2x2x1
jax: 0.10.0
libtpu: 0.0.40
codegen_flags: <defaults>
</compile_context>

<pallas_src>
import numpy as np
import jax
import jax.numpy as jnp
from jax.experimental import pallas as pl
from jax.experimental.pallas import tpu as pltpu


# ----------------------------- Pallas kernel --------------------------------

def _fused_conv_decode_kernel(x_ref, w_ref, b_ref, off_ref, rp_ref, o_ref):
    """1x1 conv (as matmul) + YOLO decode epilogue, channel-major layout.

    Block shapes (leading batch dim squeezed):
      x_ref  : (in_ch, tp)     bf16 input pixels, channel-major
      w_ref  : (out_ch, in_ch) bf16 conv weight
      b_ref  : (out_ch, 1)     f32 conv bias
      off_ref: (2, tp)         f32; row 0 = grid x offset, row 1 = grid y offset
      rp_ref : (out_ch, 4)     f32 per-row decode params:
                 col 0: 1.0 for w/h rows (exp rows), else 0.0
                 col 1: row multiplier (stride | anchor_px | 1.0)
                 col 2: 1.0 for x rows (add grid-x offset)
                 col 3: 1.0 for y rows (add grid-y offset)
      o_ref  : (out_ch, tp)    f32 decoded output, channel order a*nC + c
    """
    # (out_ch, in_ch) @ (in_ch, tp) -> (out_ch, tp), f32 accumulation on MXU.
    t = jnp.dot(w_ref[...], x_ref[...],
                preferred_element_type=jnp.float32) + b_ref[...]

    # Full-tile transcendentals in the native layout (EUP slot is otherwise
    # idle); combine with per-row selects on the VPU.
    sig = jax.nn.sigmoid(t)
    ex = jnp.exp(t)

    rp = rp_ref[...]                              # (out_ch, 4)
    off = off_ref[...]                            # (2, tp)
    off_full = rp[:, 2:3] * off[0:1, :] + rp[:, 3:4] * off[1:2, :]
    is_wh = rp[:, 0:1] > 0.5

    # Single lane-dense unmasked store of the whole tile.
    o_ref[...] = jnp.where(is_wh, ex, sig + off_full) * rp[:, 1:2]


def _pick_pixel_tile(P, in_ch, out_ch, n_batch,
                     in_bytes=2, out_bytes=4, budget_bytes=12 * 1024 * 1024):
    """Largest lane-dense pixel tile whose double-buffered blocks fit a
    conservative scoped-VMEM budget (safe on v5e 16 MiB default and v7x)."""
    p128 = ((P + 127) // 128) * 128
    # resident params (weight / bias / row params), conservatively x2
    fixed = 2 * (out_ch * in_ch * in_bytes + out_ch * 4 + out_ch * 4 * 4)
    # per output-lane cost of double-buffered x / off / out blocks
    per_lane = 2 * (in_ch * in_bytes + out_ch * out_bytes + 2 * 4)
    cap = max(128, (budget_bytes - fixed) // max(per_lane, 1))
    tp = 128
    for cand in (1024, 512, 256, 128):
        if cand <= cap:
            tp = cand
            break
    tp = min(tp, p128)
    # keep >=2 grid steps so both v7x TensorCores get work even at batch 1
    while n_batch == 1 and tp > 128 and p128 // tp < 2:
        tp //= 2
    return tp


# ------------------------------- YOLO layer ---------------------------------

class YOLOLayerPallas:
    def __init__(self, config, layer_no, in_ch, key):
        if config["name"] == "yolov3":
            self.stride = [32, 16, 8][layer_no]
        else:
            self.stride = [32, 16][layer_no]
        self.n_classes = config["n_classes"]
        self.all_anchors = [
            (w / self.stride, h / self.stride) for w, h in config["anchors"]
        ]
        self.anchor_indices = config["anchor_mask"][layer_no]
        self.anchors = np.array(
            [self.all_anchors[i] for i in self.anchor_indices], dtype=np.float32
        )
        self.n_anchors = len(self.anchor_indices)
        self.in_ch = in_ch
        self.out_ch = self.n_anchors * (self.n_classes + 5)

        # Deterministic parameter init (Conv2d(in_ch, out_ch, k=1) equivalent).
        kw, kb = jax.random.split(key)
        bound = 1.0 / np.sqrt(in_ch)
        # PyTorch weight shape (out_ch, in_ch, 1, 1) -> (out_ch, in_ch)
        self.w_t = jax.random.uniform(
            kw, (self.out_ch, in_ch), jnp.float32, -bound, bound
        )
        self.b = jax.random.uniform(kb, (self.out_ch,), jnp.float32, -bound, bound)

        # Per-row decode parameters (out_ch, 4): passed as a kernel input so
        # nothing gets captured as a constant inside the kernel.
        nA, nC = self.n_anchors, self.n_classes + 5
        is_wh = np.zeros((self.out_ch,), np.float32)
        mul = np.ones((self.out_ch,), np.float32)
        sel_x = np.zeros((self.out_ch,), np.float32)
        sel_y = np.zeros((self.out_ch,), np.float32)
        for a in range(nA):
            base = a * nC
            sel_x[base + 0] = 1.0
            sel_y[base + 1] = 1.0
            mul[base + 0] = self.stride
            mul[base + 1] = self.stride
            is_wh[base + 2] = 1.0
            is_wh[base + 3] = 1.0
            mul[base + 2] = self.anchors[a, 0] * self.stride  # anchor in pixels
            mul[base + 3] = self.anchors[a, 1] * self.stride
        self.row_params = jnp.asarray(
            np.stack([is_wh, mul, sel_x, sel_y], axis=1)
        )

        # bf16 copies for the HBM-bound matmul inputs (f32 accumulation kept).
        self.w_bf16 = self.w_t.astype(jnp.bfloat16)
        self.b_col = self.b.reshape(self.out_ch, 1)

        self._forward = jax.jit(self._forward_impl)

    # ---- inference forward (labels=None path of YOLOLayer.forward) ----
    def __call__(self, xin):
        return self._forward(xin)

    def _forward_impl(self, xin):
        # xin: NCHW (nB, in_ch, nG, nG)
        nB, _, nG, _ = xin.shape
        nA = self.n_anchors
        nC = self.n_classes + 5
        P = nG * nG
        tp = _pick_pixel_tile(P, self.in_ch, self.out_ch, nB)
        P_pad = pl.cdiv(P, tp) * tp

        # Channel-major slab: pure reshape of contiguous NCHW, cast to bf16,
        # pad pixel axis to a lane-dense multiple of the tile.
        x_mat = xin.reshape(nB, self.in_ch, P).astype(jnp.bfloat16)
        if P_pad != P:
            x_mat = jnp.pad(x_mat, ((0, 0), (0, 0), (0, P_pad - P)))

        # Grid x/y offsets per pixel, computed once host-side: (2, P_pad).
        p_idx = np.arange(P_pad)
        offsets = jnp.asarray(
            np.stack(
                [(p_idx % nG).astype(np.float32), (p_idx // nG).astype(np.float32)],
                axis=0,
            )
        )

        cost = pl.CostEstimate(
            flops=2 * nB * self.out_ch * self.in_ch * P_pad,
            transcendentals=2 * nB * self.out_ch * P_pad,
            bytes_accessed=(
                x_mat.size * 2
                + self.w_bf16.size * 2
                + self.out_ch * 4
                + offsets.size * 4
                + self.row_params.size * 4
                + nB * self.out_ch * P_pad * 4
            ),
        )

        y = pl.pallas_call(
            _fused_conv_decode_kernel,
            out_shape=jax.ShapeDtypeStruct((nB, self.out_ch, P_pad), jnp.float32),
            grid=(nB, P_pad // tp),
            in_specs=[
                pl.BlockSpec((None, self.in_ch, tp), lambda b, p: (b, 0, p)),
                pl.BlockSpec((self.out_ch, self.in_ch), lambda b, p: (0, 0)),
                pl.BlockSpec((self.out_ch, 1), lambda b, p: (0, 0)),
                pl.BlockSpec((2, tp), lambda b, p: (0, p)),
                pl.BlockSpec((self.out_ch, 4), lambda b, p: (0, 0)),
            ],
            out_specs=pl.BlockSpec((None, self.out_ch, tp), lambda b, p: (b, 0, p)),
            compiler_params=pltpu.CompilerParams(
                dimension_semantics=("parallel", "parallel")
            ),
            cost_estimate=cost,
        )(x_mat, self.w_bf16, self.b_col, offsets, self.row_params)

        # Crop lane padding, then reorder to PyTorch's (nB, nA*nG*nG, nC).
        # TODO(synk): downstream consumers could keep the channel-major
        # (nB, out_ch, P) layout and skip this transpose entirely.
        y = y[:, :, :P]
        out = y.reshape(nB, nA, nC, nG, nG)
        out = jnp.transpose(out, (0, 1, 3, 4, 2)).reshape(nB, nA * P, nC)
        return out

    # Pure-JAX reference of the same forward path (same bf16-quantized conv
    # inputs, f32 accumulation), for verification.
    def reference(self, xin):
        nB, _, nG, _ = xin.shape
        nA = self.n_anchors
        nC = self.n_classes + 5
        y = jnp.einsum(
            "bchw,oc->bohw",
            xin.astype(jnp.bfloat16),
            self.w_bf16,
            preferred_element_type=jnp.float32,
        ) + self.b.reshape(1, -1, 1, 1)
        x = y.reshape(nB, nA, nC, nG, nG).transpose(0, 1, 3, 4, 2)
        sig_idx = np.r_[:2, 4:nC]
        x = x.at[..., sig_idx].set(jax.nn.sigmoid(x[..., sig_idx]))
        yy, xx = jnp.meshgrid(
            jnp.arange(nG, dtype=jnp.float32),
            jnp.arange(nG, dtype=jnp.float32),
            indexing="ij",
        )
        aw = jnp.asarray(self.anchors[:, 0]).reshape(1, nA, 1, 1)
        ah = jnp.asarray(self.anchors[:, 1]).reshape(1, nA, 1, 1)
        pred = jnp.stack(
            [x[..., 0] + xx, x[..., 1] + yy,
             jnp.exp(x[..., 2]) * aw, jnp.exp(x[..., 3]) * ah],
            axis=-1,
        )
        return jnp.concatenate(
            [pred * self.stride, x[..., 4:]], axis=-1
        ).reshape(nB, -1, nC)


# --------------------------------- main --------------------------------------

if __name__ == "__main__":
    config = {
        "name": "yolov3",
        "n_classes": 3,
        "ignore_threshold": 0.7,
        "anchors": [(10, 13), (16, 30), (33, 23), (30, 61), (62, 45),
                    (59, 119), (116, 90), (156, 198), (373, 326)],
        "anchor_mask": [[6, 7, 8], [3, 4, 5], [0, 1, 2]],
    }

    key = jax.random.PRNGKey(0)
    k_param, k_x = jax.random.split(key)

    layer = YOLOLayerPallas(config, layer_no=0, in_ch=4, key=k_param)

    x = jax.random.normal(k_x, (2, 4, 16, 16), dtype=jnp.float32)

    out = jax.block_until_ready(layer(x))

    ref = jax.block_until_ready(layer.reference(x))
    assert out.shape == ref.shape == (2, 3 * 16 * 16, 8)
    np.testing.assert_allclose(np.asarray(out), np.asarray(ref),
                               rtol=1e-3, atol=1e-3)

    print("KERNEL_OK")
</pallas_src>

<mosaic_0001>
module attributes {stable_mosaic.version = 11 : i64} {
  func.func @_fused_conv_decode_kernel(%arg0: i32, %arg1: i32, %arg2: memref<1x4x256xbf16, #tpu.memory_space<vmem>>, %arg3: memref<24x4xbf16, #tpu.memory_space<vmem>>, %arg4: memref<24x1xf32, #tpu.memory_space<vmem>>, %arg5: memref<2x256xf32, #tpu.memory_space<vmem>>, %arg6: memref<24x4xf32, #tpu.memory_space<vmem>>, %arg7: memref<1x24x256xf32, #tpu.memory_space<vmem>>) attributes {dimension_semantics = [#tpu.dimension_semantics<parallel>, #tpu.dimension_semantics<parallel>], iteration_bounds = array<i64: 2, 1>, scalar_prefetch = 0 : i64, scratch_operands = 0 : i64, tpu.core_type = #tpu.core_type<tc>, window_params = [{transform_indices = @transform_0, window_bounds = array<i64: 1, 4, 256>}, {pipeline_mode = #tpu.pipeline_mode<synchronous>, transform_indices = @transform_1, window_bounds = array<i64: 24, 4>}, {pipeline_mode = #tpu.pipeline_mode<synchronous>, transform_indices = @transform_2, window_bounds = array<i64: 24, 1>}, {transform_indices = @transform_3, window_bounds = array<i64: 2, 256>}, {pipeline_mode = #tpu.pipeline_mode<synchronous>, transform_indices = @transform_4, window_bounds = array<i64: 24, 4>}, {transform_indices = @transform_5, window_bounds = array<i64: 1, 24, 256>}]} {
    %c0 = arith.constant 0 : index
    %c0_0 = arith.constant 0 : index
    %0 = vector.load %arg3[%c0, %c0_0] : memref<24x4xbf16, #tpu.memory_space<vmem>>, vector<24x4xbf16>
    %c0_1 = arith.constant 0 : index
    %c0_2 = arith.constant 0 : index
    %c0_3 = arith.constant 0 : index
    %1 = vector.load %arg2[%c0_1, %c0_2, %c0_3] : memref<1x4x256xbf16, #tpu.memory_space<vmem>>, vector<1x4x256xbf16>
    %2 = vector.shape_cast %1 : vector<1x4x256xbf16> to vector<4x256xbf16>
    %cst = arith.constant dense<0.000000e+00> : vector<24x256xf32>
    %3 = tpu.matmul %0, %2, %cst {dimension_numbers = #tpu.dot_dimension_numbers<[1], [0], [0], [1], [0, 0, 1, 1], [], []>} : vector<24x4xbf16>, vector<4x256xbf16>, vector<24x256xf32> -> vector<24x256xf32>
    %c0_4 = arith.constant 0 : index
    %c0_5 = arith.constant 0 : index
    %4 = vector.load %arg4[%c0_4, %c0_5] : memref<24x1xf32, #tpu.memory_space<vmem>>, vector<24x1xf32>
    %5 = vector.broadcast %4 : vector<24x1xf32> to vector<24x256xf32>
    %6 = arith.addf %3, %5 : vector<24x256xf32>
    %7 = arith.negf %6 : vector<24x256xf32>
    %8 = math.exp %7 : vector<24x256xf32>
    %cst_6 = arith.constant 1.000000e+00 : f32
    %9 = vector.broadcast %cst_6 : f32 to vector<24x256xf32>
    %10 = arith.addf %9, %8 : vector<24x256xf32>
    %11 = arith.divf %9, %10 : vector<24x256xf32>
    %12 = math.exp %6 : vector<24x256xf32>
    %c0_7 = arith.constant 0 : index
    %c0_8 = arith.constant 0 : index
    %13 = vector.load %arg6[%c0_7, %c0_8] : memref<24x4xf32, #tpu.memory_space<vmem>>, vector<24x4xf32>
    %c0_9 = arith.constant 0 : index
    %c0_10 = arith.constant 0 : index
    %14 = vector.load %arg5[%c0_9, %c0_10] : memref<2x256xf32, #tpu.memory_space<vmem>>, vector<2x256xf32>
    %15 = vector.extract_strided_slice %13 {offsets = [0, 2], sizes = [24, 1], strides = [1, 1]} : vector<24x4xf32> to vector<24x1xf32>
    %16 = vector.extract_strided_slice %14 {offsets = [0, 0], sizes = [1, 256], strides = [1, 1]} : vector<2x256xf32> to vector<1x256xf32>
    %17 = vector.broadcast %15 : vector<24x1xf32> to vector<24x256xf32>
    %18 = vector.broadcast %16 : vector<1x256xf32> to vector<24x256xf32>
    %19 = arith.mulf %17, %18 : vector<24x256xf32>
    %20 = vector.extract_strided_slice %13 {offsets = [0, 3], sizes = [24, 1], strides = [1, 1]} : vector<24x4xf32> to vector<24x1xf32>
    %21 = vector.extract_strided_slice %14 {offsets = [1, 0], sizes = [1, 256], strides = [1, 1]} : vector<2x256xf32> to vector<1x256xf32>
    %22 = vector.broadcast %20 : vector<24x1xf32> to vector<24x256xf32>
    %23 = vector.broadcast %21 : vector<1x256xf32> to vector<24x256xf32>
    %24 = arith.mulf %22, %23 : vector<24x256xf32>
    %25 = arith.addf %19, %24 : vector<24x256xf32>
    %26 = vector.extract_strided_slice %13 {offsets = [0, 0], sizes = [24, 1], strides = [1, 1]} : vector<24x4xf32> to vector<24x1xf32>
    %cst_11 = arith.constant 5.000000e-01 : f32
    %27 = vector.broadcast %cst_11 : f32 to vector<24x1xf32>
    %28 = arith.cmpf ogt, %26, %27 : vector<24x1xf32>
    %29 = arith.addf %11, %25 : vector<24x256xf32>
    %30 = vector.shape_cast %28 : vector<24x1xi1> to vector<24x1xi1>
    %31 = vector.broadcast %30 : vector<24x1xi1> to vector<24x256xi1>
    %32 = arith.select %31, %12, %29 : vector<24x256xi1>, vector<24x256xf32>
    %33 = vector.extract_strided_slice %13 {offsets = [0, 1], sizes = [24, 1], strides = [1, 1]} : vector<24x4xf32> to vector<24x1xf32>
    %34 = vector.broadcast %33 : vector<24x1xf32> to vector<24x256xf32>
    %35 = arith.mulf %32, %34 : vector<24x256xf32>
    %c0_12 = arith.constant 0 : index
    %c0_13 = arith.constant 0 : index
    %c0_14 = arith.constant 0 : index
    %36 = vector.load %arg7[%c0_12, %c0_13, %c0_14] : memref<1x24x256xf32, #tpu.memory_space<vmem>>, vector<1x24x256xf32>
    %37 = vector.shape_cast %36 : vector<1x24x256xf32> to vector<24x256xf32>
    %38 = vector.shape_cast %35 : vector<24x256xf32> to vector<1x24x256xf32>
    tpu.vector_store %arg7[%c0_12, %c0_13, %c0_14], %38 {strides = array<i32>} : memref<1x24x256xf32, #tpu.memory_space<vmem>>, vector<1x24x256xf32>,
    return
  }
  func.func @transform_0(%arg0: i32, %arg1: i32) -> (i32, i32, i32) {
    %c0_i32 = arith.constant 0 : i32
    %c0_i32_0 = arith.constant 0 : i32
    return %arg0, %c0_i32, %arg1 : i32, i32, i32
  }
  func.func @transform_1(%arg0: i32, %arg1: i32) -> (i32, i32) {
    %c0_i32 = arith.constant 0 : i32
    %c0_i32_0 = arith.constant 0 : i32
    %c0_i32_1 = arith.constant 0 : i32
    return %c0_i32, %c0_i32_0 : i32, i32
  }
  func.func @transform_2(%arg0: i32, %arg1: i32) -> (i32, i32) {
    %c0_i32 = arith.constant 0 : i32
    %c0_i32_0 = arith.constant 0 : i32
    %c0_i32_1 = arith.constant 0 : i32
    return %c0_i32, %c0_i32_0 : i32, i32
  }
  func.func @transform_3(%arg0: i32, %arg1: i32) -> (i32, i32) {
    %c0_i32 = arith.constant 0 : i32
    %c0_i32_0 = arith.constant 0 : i32
    return %c0_i32, %arg1 : i32, i32
  }
  func.func @transform_4(%arg0: i32, %arg1: i32) -> (i32, i32) {
    %c0_i32 = arith.constant 0 : i32
    %c0_i32_0 = arith.constant 0 : i32
    %c0_i32_1 = arith.constant 0 : i32
    return %c0_i32, %c0_i32_0 : i32, i32
  }
  func.func @transform_5(%arg0: i32, %arg1: i32) -> (i32, i32, i32) {
    %c0_i32 = arith.constant 0 : i32
    %c0_i32_0 = arith.constant 0 : i32
    return %arg0, %c0_i32, %arg1 : i32, i32, i32
  }
}

</mosaic_0001>

<llo_original>
// kernel: _forward_impl.1
$region0: #{_forward_impl.1}
  #allocation0 [shape = 'u32[]', space=smem, size = 0x4, offset = 0x4, fixed_abs, tag = 'smem constant byte address 0x4 - core index']
  #allocation1 [shape = 'u32[144,128]{1,0:T(1,128)}', space=vmem, size = 0x12000, scoped, tag = 'internal scratch']
  %s0 = inlined_call_operand.vmem [shape: bf16[2,4,256], index: 0, kind: input, shape index: {}]
  %s1 = inlined_call_operand.vmem [shape: bf16[24,4], index: 1, kind: input, shape index: {}]
  %s2 = inlined_call_operand.vmem [shape: f32[24,1], index: 2, kind: input, shape index: {}]
  %s3 = inlined_call_operand.vmem [shape: f32[2,256], index: 3, kind: input, shape index: {}]
  %s4 = inlined_call_operand.vmem [shape: f32[24,4], index: 4, kind: input, shape index: {}]
  %s5 = inlined_call_operand.vmem [shape: f32[2,24,256], index: 5, kind: output, shape index: {}]
  %s6 = sld [smem:[#allocation0]]
  $region53: #{_forward_impl.1} parent=0
    _
  %s8 = ssub.s32 1, %s6
  %s9 = scalar_select 0, %s8, %s6
  loop: start=0, step=1, limit=4
  $region2: #{_forward_impl.1} parent=0 // loop_pre_header
    _
  $region3: #{_forward_impl.1} parent=0 // loop_header
    %s11 = sphi 0, %s15
    %p12 = scmp.ge.s32.totalorder %s11, 4
    %s18 = sphi 0, %s30
    %s19 = sphi 0, %s26
    %s20 = sphi 0, %s18
    %s21 = sphi 0, %s19
    %s22 = sphi 0, %s20
    %s23 = sphi 0, %s21
    %s35 = sphi 0, %s37
    %s38 = sphi 0, %s35
    %s39 = sphi 0, %s38
    %s55 = sphi 0, %s39
    %s59 = sphi 0, %s59
    %s61 = sphi 0, %s59
    %s62 = sphi 0, %s61
    %s76 = sphi 0, %s62
    %s80 = sphi 0, %s80
    %s82 = sphi 0, %s80
    %s83 = sphi 0, %s82
    %s97 = sphi 0, %s83
    %s103 = sphi 0, %s105
    %s106 = sphi 0, %s103
    %s107 = sphi 0, %s106
    %s123 = sphi 0, %s107
    %s127 = sphi 0, %s127
    %s129 = sphi 0, %s127
    %s130 = sphi 0, %s129
    %s144 = sphi 0, %s130
    %s152 = sphi 0, %s154
    %s155 = sphi 0, %s152
    %s156 = sphi 0, %s155
    %s172 = sphi 0, %s156
  $region4: #{_forward_impl.1} parent=0 // loop_header_branch
    %14 = sbr.rel (%p12) target = $region8
  $region5: #{_forward_impl.1} parent=0 // loop_body
    %s16 = ssub.s32 %s11, 1
    %s17 = ssub.s32 %s11, 2
    %s24 = sadd.s32 1, %s19
    %p25 = scmp.ge.s32.totalorder %s24, 1
    %s26 = scalar_select %p25, 0, %s24
    %s27 = sadd.s32 1, %s18
    %s28 = scalar_select %p25, %s27, %s18
    %p29 = scmp.ge.s32.totalorder %s28, 2
    %s30 = scalar_select %p29, 0, %s28
    %s31 = ssub.s32 %s18, %s30
    %s32 = ssub.s32 %s19, %s26
    %s33 = sor.u32 %s31, %s32
    %p34 = scmp.eq.s32.totalorder %s33, 0
    %s36 = sadd.s32 %s35, 1
    %s37 = scalar_select %p34, %s35, %s36
    %p40 = pneg %p34
    %p41 = scmp.eq.s32.totalorder %s11, 1
    %p42 = por %p40, %p41
    %p43 = scmp.ne.s32.totalorder %s35, %s38
    %p44 = scmp.eq.s32.totalorder %s11, 0
    %p45 = por %p43, %p44
    %p46 = scmp.ne.s32.totalorder %s35, %s38
    %p47 = scmp.eq.s32.totalorder %s16, 1
    %p48 = por %p46, %p47
    %p49 = scmp.ne.s32.totalorder %s38, %s39
    %p50 = scmp.eq.s32.totalorder %s16, 0
    %p51 = por %p49, %p50
    %p52 = scmp.ne.s32.totalorder %s38, %s39
    %p53 = scmp.eq.s32.totalorder %s17, 1
    %p54 = por %p52, %p53
    %p56 = scmp.ne.s32.totalorder %s39, %s55
    %p57 = scmp.eq.s32.totalorder %s17, 0
    %p58 = por %p56, %p57
    %s60 = sadd.s32 %s59, 1
    %p63 = scmp.eq.s32.totalorder %s11, 1
    %p64 = scmp.ne.s32.totalorder %s59, %s61
    %p65 = scmp.eq.s32.totalorder %s11, 0
    %p66 = por %p64, %p65
    %p67 = scmp.ne.s32.totalorder %s59, %s61
    %p68 = scmp.eq.s32.totalorder %s16, 1
    %p69 = por %p67, %p68
    %p70 = scmp.ne.s32.totalorder %s61, %s62
    %p71 = scmp.eq.s32.totalorder %s16, 0
    %p72 = por %p70, %p71
    %p73 = scmp.ne.s32.totalorder %s61, %s62
    %p74 = scmp.eq.s32.totalorder %s17, 1
    %p75 = por %p73, %p74
    %p77 = scmp.ne.s32.totalorder %s62, %s76
    %p78 = scmp.eq.s32.totalorder %s17, 0
    %p79 = por %p77, %p78
    %s81 = sadd.s32 %s80, 1
    %p84 = scmp.eq.s32.totalorder %s11, 1
    %p85 = scmp.ne.s32.totalorder %s80, %s82
    %p86 = scmp.eq.s32.totalorder %s11, 0
    %p87 = por %p85, %p86
    %p88 = scmp.ne.s32.totalorder %s80, %s82
    %p89 = scmp.eq.s32.totalorder %s16, 1
    %p90 = por %p88, %p89
    %p91 = scmp.ne.s32.totalorder %s82, %s83
    %p92 = scmp.eq.s32.totalorder %s16, 0
    %p93 = por %p91, %p92
    %p94 = scmp.ne.s32.totalorder %s82, %s83
    %p95 = scmp.eq.s32.totalorder %s17, 1
    %p96 = por %p94, %p95
    %p98 = scmp.ne.s32.totalorder %s83, %s97
    %p99 = scmp.eq.s32.totalorder %s17, 0
    %p100 = por %p98, %p99
    %s101 = ssub.s32 %s19, %s26
    %p102 = scmp.eq.s32.totalorder %s101, 0
    %s104 = sadd.s32 %s103, 1
    %s105 = scalar_select %p102, %s103, %s104
    %p108 = pneg %p102
    %p109 = scmp.eq.s32.totalorder %s11, 1
    %p110 = por %p108, %p109
    %p111 = scmp.ne.s32.totalorder %s103, %s106
    %p112 = scmp.eq.s32.totalorder %s11, 0
    %p113 = por %p111, %p112
    %p114 = scmp.ne.s32.totalorder %s103, %s106
    %p115 = scmp.eq.s32.totalorder %s16, 1
    %p116 = por %p114, %p115
    %p117 = scmp.ne.s32.totalorder %s106, %s107
    %p118 = scmp.eq.s32.totalorder %s16, 0
    %p119 = por %p117, %p118
    %p120 = scmp.ne.s32.totalorder %s106, %s107
    %p121 = scmp.eq.s32.totalorder %s17, 1
    %p122 = por %p120, %p121
    %p124 = scmp.ne.s32.totalorder %s107, %s123
    %p125 = scmp.eq.s32.totalorder %s17, 0
    %p126 = por %p124, %p125
    %s128 = sadd.s32 %s127, 1
    %p131 = scmp.eq.s32.totalorder %s11, 1
    %p132 = scmp.ne.s32.totalorder %s127, %s129
    %p133 = scmp.eq.s32.totalorder %s11, 0
    %p134 = por %p132, %p133
    %p135 = scmp.ne.s32.totalorder %s127, %s129
    %p136 = scmp.eq.s32.totalorder %s16, 1
    %p137 = por %p135, %p136
    %p138 = scmp.ne.s32.totalorder %s129, %s130
    %p139 = scmp.eq.s32.totalorder %s16, 0
    %p140 = por %p138, %p139
    %p141 = scmp.ne.s32.totalorder %s129, %s130
    %p142 = scmp.eq.s32.totalorder %s17, 1
    %p143 = por %p141, %p142
    %p145 = scmp.ne.s32.totalorder %s130, %s144
    %p146 = scmp.eq.s32.totalorder %s17, 0
    %p147 = por %p145, %p146
    %s148 = ssub.s32 %s18, %s30
    %s149 = ssub.s32 %s19, %s26
    %s150 = sor.u32 %s148, %s149
    %p151 = scmp.eq.s32.totalorder %s150, 0
    %s153 = sadd.s32 %s152, 1
    %s154 = scalar_select %p151, %s152, %s153
    %p157 = pneg %p151
    %p158 = scmp.eq.s32.totalorder %s11, 1
    %p159 = por %p157, %p158
    %p160 = scmp.ne.s32.totalorder %s152, %s155
    %p161 = scmp.eq.s32.totalorder %s11, 0
    %p162 = por %p160, %p161
    %p163 = scmp.ne.s32.totalorder %s152, %s155
    %p164 = scmp.eq.s32.totalorder %s16, 1
    %p165 = por %p163, %p164
    %p166 = scmp.ne.s32.totalorder %s155, %s156
    %p167 = scmp.eq.s32.totalorder %s16, 0
    %p168 = por %p166, %p167
    %p169 = scmp.ne.s32.totalorder %s155, %s156
    %p170 = scmp.eq.s32.totalorder %s17, 1
    %p171 = por %p169, %p170
    %p173 = scmp.ne.s32.totalorder %s156, %s172
    %p174 = scmp.eq.s32.totalorder %s17, 0
    %p175 = por %p173, %p174
    %p176 = scmp.le.s32.totalorder 1, %s11
    %p177 = scmp.lt.s32.totalorder %s11, 3
    %p178 = pnand %p176, %p177
    %p179 = pneg %p178
    // Predicated region
    $region9: #{_forward_impl.1} parent=5 // pred_check
      _
    $region10: #{_forward_impl.1} parent=5 // pred_check_branch
      %181 = sbr.rel (%p178) target = $region12
    $region11: #{_forward_impl.1} parent=5 // pred_region
      %s182 = ssub.s32 %s11, 1
      // Predicated region
      $region13: #{_forward_impl.1} parent=11 // pred_check
        %p183 = pneg %p72
      $region14: #{_forward_impl.1} parent=11 // pred_check_branch
        %185 = sbr.rel (%p183) target = $region16
      $region15: #{_forward_impl.1} parent=11 // pred_region
        _
      $region16: #{_forward_impl.1} parent=11 // pred_fallthru
        _
      // Predicated region
      $region17: #{_forward_impl.1} parent=11 // pred_check
        %p186 = pneg %p93
      $region18: #{_forward_impl.1} parent=11 // pred_check_branch
        %188 = sbr.rel (%p186) target = $region20
      $region19: #{_forward_impl.1} parent=11 // pred_region
        _
      $region20: #{_forward_impl.1} parent=11 // pred_fallthru
        _
      // Predicated region
      $region21: #{_forward_impl.1} parent=11 // pred_check
        %p189 = pneg %p119
      $region22: #{_forward_impl.1} parent=11 // pred_check_branch
        %191 = sbr.rel (%p189) target = $region24
      $region23: #{_forward_impl.1} parent=11 // pred_region
        %s192 = smul.u32 2, %s21
        %p193 = scmp.lt.s32.totalorder %s192, 1
        %s194 = scalar_select %p193, %s192, 1
        %s195 = smul.addr %s194, 2
        %s196 = scalar_lea.vmem %s3, %s195
        %s197 = smul.u32 2, %s21
      $region24: #{_forward_impl.1} parent=11 // pred_fallthru
        _
      // Predicated region
      $region25: #{_forward_impl.1} parent=11 // pred_check
        %p198 = pneg %p140
      $region26: #{_forward_impl.1} parent=11 // pred_check_branch
        %200 = sbr.rel (%p198) target = $region28
      $region27: #{_forward_impl.1} parent=11 // pred_region
        _
      $region28: #{_forward_impl.1} parent=11 // pred_fallthru
        _
    $region12: #{_forward_impl.1} parent=5 // pred_fallthru
      _
    %p201 = scmp.lt.s32.totalorder %s11, 2
    // Predicated region
    $region29: #{_forward_impl.1} parent=5 // pred_check
      %p202 = pneg %p201
    $region30: #{_forward_impl.1} parent=5 // pred_check_branch
      %204 = sbr.rel (%p202) target = $region32
    $region31: #{_forward_impl.1} parent=5 // pred_region
      // Predicated region
      $region33: #{_forward_impl.1} parent=31 // pred_check
        %p205 = pneg %p45
      $region34: #{_forward_impl.1} parent=31 // pred_check_branch
        %207 = sbr.rel (%p205) target = $region36
      $region35: #{_forward_impl.1} parent=31 // pred_region
        %s208 = smul.u32 2, %s19
        %p209 = scmp.lt.s32.totalorder %s18, 1
        %s210 = scalar_select %p209, %s18, 1
        %p211 = scmp.lt.s32.totalorder %s208, 1
        %s212 = scalar_select %p211, %s208, 1
        %s213 = smul.addr %s210, 2
        %s214 = sadd.s32 %s212, %s213
        %s215 = smul.addr %s214, 2
        %s216 = scalar_lea.vmem %s0, %s215
        %s217 = smul.u32 2, %s19
      $region36: #{_forward_impl.1} parent=31 // pred_fallthru
        _
    $region32: #{_forward_impl.1} parent=5 // pred_fallthru
      _
    %p218 = scmp.le.s32.totalorder 1, %s11
    %p219 = scmp.lt.s32.totalorder %s11, 3
    %p220 = pnand %p218, %p219
    %p221 = pneg %p220
    // Predicated region
    $region37: #{_forward_impl.1} parent=5 // pred_check
      _
    $region38: #{_forward_impl.1} parent=5 // pred_check_branch
      %223 = sbr.rel (%p220) target = $region40
    $region39: #{_forward_impl.1} parent=5 // pred_region
      %s224 = ssub.s32 %s11, 1
      %s225 = smul.u32 2, %s21
      %p226 = scmp.lt.s32.totalorder %s20, 1
      %s227 = scalar_select %p226, %s20, 1
      %p228 = scmp.lt.s32.totalorder %s225, 1
      %s229 = scalar_select %p228, %s225, 1
      %s230 = smul.addr %s227, 2
      %s231 = sadd.s32 %s229, %s230
      %s232 = smul.addr %s231, 2
      %s233 = scalar_lea.vmem %s0, %s232
      %p234 = pneg %p51
      %p235 = pneg %p48
      %p236 = pneg %p72
      %p237 = pneg %p69
      %p238 = pneg %p93
      %p239 = pneg %p90
      %s240 = smul.u32 2, %s21
      %p241 = scmp.lt.s32.totalorder %s240, 1
      %s242 = scalar_select %p241, %s240, 1
      %s243 = smul.addr %s242, 2
      %s244 = scalar_lea.vmem %s3, %s243
      %p245 = pneg %p119
      %p246 = pneg %p116
      %p247 = pneg %p140
      %p248 = pneg %p137
      %p249 = pneg %p168
      %p250 = pneg %p165
      %s251 = smul.u32 2, %s21
      %p252 = scmp.lt.s32.totalorder %s20, 1
      %s253 = scalar_select %p252, %s20, 1
      %p254 = scmp.lt.s32.totalorder %s251, 1
      %s255 = scalar_select %p254, %s251, 1
      %s256 = smul.addr %s253, 6
      %s257 = sadd.s32 %s255, %s256
      %s258 = smul.addr %s257, 8
      %s259 = scalar_lea.vmem %s5, %s258
      %s260 = smul.u32 2, %s21
      %p261 = scmp.lt.s32.totalorder %s20, 1
      %s262 = scalar_select %p261, %s20, 1
      %p263 = scmp.lt.s32.totalorder %s260, 1
      %s264 = scalar_select %p263, %s260, 1
      %s265 = smul.addr %s262, 2
      %s266 = sadd.s32 %s264, %s265
      %s267 = smul.addr %s266, 2
      %s268 = scalar_lea.vmem %s0, %s267
      %s269 = smul.u32 2, %s21
      %s270 = smul.u32 2, %s21
      %p271 = scmp.lt.s32.totalorder %s270, 1
      %s272 = scalar_select %p271, %s270, 1
      %s273 = smul.addr %s272, 2
      %s274 = scalar_lea.vmem %s3, %s273
      %s275 = smul.u32 2, %s21
      %s276 = smul.u32 2, %s21
      %p277 = scmp.lt.s32.totalorder %s20, 1
      %s278 = scalar_select %p277, %s20, 1
      %p279 = scmp.lt.s32.totalorder %s276, 1
      %s280 = scalar_select %p279, %s276, 1
      %s281 = smul.addr %s278, 6
      %s282 = sadd.s32 %s280, %s281
      %s283 = smul.addr %s282, 8
      %s284 = scalar_lea.vmem %s5, %s283
      %s285 = smul.u32 2, %s21
      %v287 = vld [vmem:[%s1] sm:$0xf]
      %v288 = vld [vmem:[%s1 + $0x4] sm:$0xf]
      %v289 = vld [vmem:[%s1 + $0x8] sm:$0xf]
      %v290 = vld [vmem:[%s268] sm:$0xf]
      %v291 = vld [vmem:[%s2] sm:$0xff]
      %v292 = vld [vmem:[%s2 + $0x8] sm:$0xff]
      %v293 = vld [vmem:[%s2 + $0x10] sm:$0xff]
      %295 = vset.pattern.permute.xlu0 0
      %296 = vperm.xlu0 %295, %v291
      %v297 = vpop.permute.xlu0 %296
      %300 = vset.pattern.permute.xlu0 0
      %301 = vperm.xlu0 %300, %v292
      %v302 = vpop.permute.xlu0 %301
      %305 = vset.pattern.permute.xlu0 0
      %306 = vperm.xlu0 %305, %v293
      %v307 = vpop.permute.xlu0 %306
      %v312 = vunpack.c.l.b16 %v287
      %v313 = vunpack.c.l.b16 %v288
      %v314 = vunpack.c.l.b16 %v289
      %v315 = vpack.c.b16 %v313, %v312
      %v316 = vpack.c.b16 %v314, %v314
      %v319 = vunpack.c.l.s4 1983009808
      %v320 = vunpack.c.0.s8 %v319
      %v321 = vlaneseq
      %v322 = vshrl.u32 %v321, 7
      %v323 = vsub.s32 %v320, %v322
      %v324 = vrot.slane %v290, %v323
      %v325 = vcombine.high %v324, %v324
      %vm326 = vcmask 31744
      %v328 = vsel %vm326, %v315, 0
      %v331 = vsel %vm326, %v316, 0
      %vm333 = vcmask 1041408
      %v335 = vsel %vm333, %v324, 0
      %v338 = vsel %vm333, %v325, 0
      %340 = vmatprep.subr.bf16.mxu0 %v338
      %341 = vmatpush1.bf16.msra.mxu0 %v335
      %342 = vmatprep.subr.bf16.mxu0 0
      %343 = vmatpush1.bf16.msra.mxu0 0
      %344 = vmatprep.subr.bf16.mxu0 0
      %345 = vmatpush1.bf16.msra.mxu0 0
      %346 = vmatprep.subr.bf16.mxu0 0
      %347 = vmatpush1.bf16.msra.mxu0 0
      %348 = vmatprep.subr.bf16.mxu0 0
      %349 = vmatpush1.bf16.msra.mxu0 0
      %350 = vmatprep.subr.bf16.mxu0 0
      %351 = vmatpush1.bf16.msra.mxu0 0
      %352 = vmatprep.subr.bf16.mxu0 0
      %353 = vmatpush1.bf16.msra.mxu0 0
      %354 = vmatprep.subr.bf16.mxu0 0
      %355 = vmatpush1.bf16.msra.mxu0 0
      %356 = vmatprep.subr.bf16.mxu0 0
      %357 = vmatpush1.bf16.msra.mxu0 0
      %358 = vmatprep.subr.bf16.mxu0 0
      %359 = vmatpush1.bf16.msra.mxu0 0
      %360 = vmatprep.subr.bf16.mxu0 0
      %361 = vmatpush1.bf16.msra.mxu0 0
      %362 = vmatprep.subr.bf16.mxu0 0
      %363 = vmatpush1.bf16.msra.mxu0 0
      %364 = vmatprep.subr.bf16.mxu0 0
      %365 = vmatpush1.bf16.msra.mxu0 0
      %366 = vmatprep.subr.bf16.mxu0 0
      %367 = vmatpush1.bf16.msra.mxu0 0
      %368 = vmatprep.subr.bf16.mxu0 0
      %369 = vmatpush1.bf16.msra.mxu0 0
      %370 = vmatprep.subr.bf16.mxu0 0
      %371 = vmatpush1.bf16.msra.mxu0 0
      %372 = vmatprep.mubr.bf16.mxu0 0
      %373 = vmatmul.mubr.bf16.gmra.mrb[0].mxu0 %v328
      %v374 = vpop.f32.mrb[0].mxu0
      %v375 = vadd.f32 %v297, %v374
      %v376 = vpop.f32.mrb[0].mxu0
      %v377 = vadd.f32 %v297, %v376
      %v378 = vpop.f32.mrb[0].mxu0
      %v379 = vadd.f32 %v302, %v378
      %v380 = vpop.f32.mrb[0].mxu0
      %v381 = vadd.f32 %v302, %v380
      %382 = vmatprep.mubr.bf16.mxu0 0
      %383 = vmatmul.mubr.bf16.gmra.mrb[0].mxu0 %v331
      %v384 = vpop.f32.mrb[0].mxu0
      %v385 = vadd.f32 %v307, %v384
      %v386 = vpop.f32.mrb[0].mxu0
      %v387 = vadd.f32 %v307, %v386
      %v388 = vpop.f32.mrb[0].mxu0
      %v389 = vpop.f32.mrb[0].mxu0
      %390 = vdwg.mxu0
      %v391 = vxor.u32 %v375, 2147483648
      %v392 = vxor.u32 %v377, 2147483648
      %v393 = vxor.u32 %v379, 2147483648
      %v394 = vxor.u32 %v381, 2147483648
      %v395 = vxor.u32 %v385, 2147483648
      %v396 = vxor.u32 %v387, 2147483648
      %v397 = vmul.f32 %v391, 1.442695
      %v398 = vpow.pop %v397
      %v399 = vmul.f32 %v392, 1.442695
      %v400 = vpow.pop %v399
      %v401 = vmul.f32 %v393, 1.442695
      %v402 = vpow.pop %v401
      %v403 = vmul.f32 %v394, 1.442695
      %v404 = vpow.pop %v403
      %v405 = vmul.f32 %v395, 1.442695
      %v406 = vpow.pop %v405
      %v407 = vmul.f32 %v396, 1.442695
      %v408 = vpow.pop %v407
      %v409 = vadd.f32 %v398, 1.0
      %v410 = vadd.f32 %v400, 1.0
      %v411 = vadd.f32 %v402, 1.0
      %v412 = vadd.f32 %v404, 1.0
      %v413 = vadd.f32 %v406, 1.0
      %v414 = vadd.f32 %v408, 1.0
      %v415 = vrcp.pop %v409
      %v416 = vmul.f32 1.0, %v415
      %v417 = vrcp.pop %v410
      %v418 = vmul.f32 1.0, %v417
      %v419 = vrcp.pop %v411
      %v420 = vmul.f32 1.0, %v419
      %v421 = vrcp.pop %v412
      %v422 = vmul.f32 1.0, %v421
      %v423 = vrcp.pop %v413
      %v424 = vmul.f32 1.0, %v423
      %v425 = vrcp.pop %v414
      %v426 = vmul.f32 1.0, %v425
      %v427 = vmul.f32 %v375, 1.442695
      %v428 = vpow.pop %v427
      %v429 = vmul.f32 %v377, 1.442695
      %v430 = vpow.pop %v429
      %v431 = vmul.f32 %v379, 1.442695
      %v432 = vpow.pop %v431
      %v433 = vmul.f32 %v381, 1.442695
      %v434 = vpow.pop %v433
      %v435 = vmul.f32 %v385, 1.442695
      %v436 = vpow.pop %v435
      %v437 = vmul.f32 %v387, 1.442695
      %v438 = vpow.pop %v437
      %v439 = vld [vmem:[%s4] sm:$0xff]
      %v440 = vld [vmem:[%s4 + $0x8] sm:$0xff]
      %v441 = vld [vmem:[%s4 + $0x10] sm:$0xff]
      %v442 = vld [vmem:[%s274] sm:$0xf]
      %444 = vset.pattern.permute.xlu0 2
      %445 = vperm.xlu0 %444, %v439
      %v446 = vpop.permute.xlu0 %445
      %449 = vset.pattern.permute.xlu0 2
      %450 = vperm.xlu0 %449, %v440
      %v451 = vpop.permute.xlu0 %450
      %454 = vset.pattern.permute.xlu0 2
      %455 = vperm.xlu0 %454, %v441
      %v456 = vpop.permute.xlu0 %455
      %v459 = vlaneseq
      %v460 = vshrl.u32 %v459, 7
      %v461 = vsub.s32 0, %v460
      %v462 = vrot.slane %v442, %v461
      %v463 = vlaneseq
      %v464 = vshrl.u32 %v463, 7
      %v465 = vsub.s32 2, %v464
      %v466 = vrot.slane %v442, %v465
      %v469 = vlaneseq
      %v470 = vshrl.u32 %v469, 7
      %v471 = vsub.s32 0, %v470
      %v472 = vrot.slane %v462, %v471
      %v473 = vlaneseq
      %v474 = vshrl.u32 %v473, 7
      %v475 = vsub.s32 0, %v474
      %v476 = vrot.slane %v466, %v475
      %v477 = vmul.f32 %v446, %v472
      %v478 = vmul.f32 %v446, %v476
      %v479 = vmul.f32 %v451, %v472
      %v480 = vmul.f32 %v451, %v476
      %v481 = vmul.f32 %v456, %v472
      %v482 = vmul.f32 %v456, %v476
      %483 = vset.pattern.permute.xlu0 3
      %484 = vperm.xlu0 %483, %v439
      %v485 = vpop.permute.xlu0 %484
      %487 = vset.pattern.permute.xlu0 3
      %488 = vperm.xlu0 %487, %v440
      %v489 = vpop.permute.xlu0 %488
      %491 = vset.pattern.permute.xlu0 3
      %492 = vperm.xlu0 %491, %v441
      %v493 = vpop.permute.xlu0 %492
      %v495 = vlaneseq
      %v496 = vshrl.u32 %v495, 7
      %v497 = vsub.s32 1, %v496
      %v498 = vrot.slane %v442, %v497
      %v499 = vlaneseq
      %v500 = vshrl.u32 %v499, 7
      %v501 = vsub.s32 3, %v500
      %v502 = vrot.slane %v442, %v501
      %v505 = vlaneseq
      %v506 = vshrl.u32 %v505, 7
      %v507 = vsub.s32 1, %v506
      %v508 = vrot.slane %v498, %v507
      %v509 = vlaneseq
      %v510 = vshrl.u32 %v509, 7
      %v511 = vsub.s32 1, %v510
      %v512 = vrot.slane %v502, %v511
      %v513 = vmul.f32 %v485, %v508
      %v514 = vmul.f32 %v485, %v512
      %v515 = vmul.f32 %v489, %v508
      %v516 = vmul.f32 %v489, %v512
      %v517 = vmul.f32 %v493, %v508
      %v518 = vmul.f32 %v493, %v512
      %v519 = vadd.f32 %v477, %v513
      %v520 = vadd.f32 %v478, %v514
      %v521 = vadd.f32 %v479, %v515
      %v522 = vadd.f32 %v480, %v516
      %v523 = vadd.f32 %v481, %v517
      %v524 = vadd.f32 %v482, %v518
      %vm525 = vcmp.gt.f32.partialorder %v439, 0.5
      %vm526 = vcmp.gt.f32.partialorder %v440, 0.5
      %vm527 = vcmp.gt.f32.partialorder %v441, 0.5
      %v528 = vadd.f32 %v416, %v519
      %v529 = vadd.f32 %v418, %v520
      %v530 = vadd.f32 %v420, %v521
      %v531 = vadd.f32 %v422, %v522
      %v532 = vadd.f32 %v424, %v523
      %v533 = vadd.f32 %v426, %v524
      %v534 = vsel %vm525, 1, 0
      %v535 = vsel %vm526, 1, 0
      %v536 = vsel %vm527, 1, 0
      %537 = vset.pattern.permute.xlu0 0
      %538 = vperm.xlu0 %537, %v534
      %v539 = vpop.permute.xlu0 %538
      %540 = vset.pattern.permute.xlu0 0
      %541 = vperm.xlu0 %540, %v535
      %v542 = vpop.permute.xlu0 %541
      %543 = vset.pattern.permute.xlu0 0
      %544 = vperm.xlu0 %543, %v536
      %v545 = vpop.permute.xlu0 %544
      %vm546 = vcmp.eq.s32.totalorder %v539, 1
      %vm547 = vcmp.eq.s32.totalorder %v542, 1
      %vm548 = vcmp.eq.s32.totalorder %v545, 1
      %v549 = vsel %vm546, %v428, %v528
      %v550 = vsel %vm546, %v430, %v529
      %v551 = vsel %vm547, %v432, %v530
      %v552 = vsel %vm547, %v434, %v531
      %v553 = vsel %vm548, %v436, %v532
      %v554 = vsel %vm548, %v438, %v533
      %555 = vset.pattern.permute.xlu0 1
      %556 = vperm.xlu0 %555, %v439
      %v557 = vpop.permute.xlu0 %556
      %559 = vset.pattern.permute.xlu0 1
      %560 = vperm.xlu0 %559, %v440
      %v561 = vpop.permute.xlu0 %560
      %563 = vset.pattern.permute.xlu0 1
      %564 = vperm.xlu0 %563, %v441
      %v565 = vpop.permute.xlu0 %564
      %v567 = vmul.f32 %v549, %v557
      %v568 = vmul.f32 %v550, %v557
      %v569 = vmul.f32 %v551, %v561
      %v570 = vmul.f32 %v552, %v561
      %v571 = vmul.f32 %v553, %v565
      %v572 = vmul.f32 %v554, %v565
      %573 = vst [vmem:[%s284] sm:$0xff] %v567
      %574 = vst [vmem:[%s284 + $0x8] sm:$0xff] %v568
      %575 = vst [vmem:[%s284 + $0x10] sm:$0xff] %v569
      %576 = vst [vmem:[%s284 + $0x18] sm:$0xff] %v570
      %577 = vst [vmem:[%s284 + $0x20] sm:$0xff] %v571
      %578 = vst [vmem:[%s284 + $0x28] sm:$0xff] %v572
      %s579 = smul.u32 2, %s21
      %p580 = scmp.lt.s32.totalorder %s20, 1
      %s581 = scalar_select %p580, %s20, 1
      %p582 = scmp.lt.s32.totalorder %s579, 1
      %s583 = scalar_select %p582, %s579, 1
      %s584 = smul.addr %s581, 6
      %s585 = sadd.s32 %s583, %s584
      %s586 = smul.addr %s585, 8
      %s587 = scalar_lea.vmem %s5, %s586
      // Predicated region
      $region41: #{_forward_impl.1} parent=39 // pred_check
        %p588 = pneg %p165
      $region42: #{_forward_impl.1} parent=39 // pred_check_branch
        %590 = sbr.rel (%p588) target = $region44
      $region43: #{_forward_impl.1} parent=39 // pred_region
        %s591 = smul.u32 2, %s21
      $region44: #{_forward_impl.1} parent=39 // pred_fallthru
        _
    $region40: #{_forward_impl.1} parent=5 // pred_fallthru
      _
    %p592 = scmp.le.s32.totalorder 2, %s11
    // Predicated region
    $region45: #{_forward_impl.1} parent=5 // pred_check
      %p593 = pneg %p592
    $region46: #{_forward_impl.1} parent=5 // pred_check_branch
      %595 = sbr.rel (%p593) target = $region48
    $region47: #{_forward_impl.1} parent=5 // pred_region
      %s596 = ssub.s32 %s11, 2
      // Predicated region
      $region49: #{_forward_impl.1} parent=47 // pred_check
        %p597 = pneg %p171
      $region50: #{_forward_impl.1} parent=47 // pred_check_branch
        %599 = sbr.rel (%p597) target = $region52
      $region51: #{_forward_impl.1} parent=47 // pred_region
        %s600 = smul.u32 2, %s23
        %p601 = scmp.lt.s32.totalorder %s22, 1
        %s602 = scalar_select %p601, %s22, 1
        %p603 = scmp.lt.s32.totalorder %s600, 1
        %s604 = scalar_select %p603, %s600, 1
        %s605 = smul.addr %s602, 6
        %s606 = sadd.s32 %s604, %s605
        %s607 = smul.addr %s606, 8
        %s608 = scalar_lea.vmem %s5, %s607
      $region52: #{_forward_impl.1} parent=47 // pred_fallthru
        _
    $region48: #{_forward_impl.1} parent=5 // pred_fallthru
      _
  $region6: #{_forward_impl.1} parent=0 // loop_footer
    %s15 = sadd.s32 1, %s11
  $region7: #{_forward_impl.1} parent=0 // loop_footer_branch
    %10 = sbr.rel target = $region3
  $region8: #{_forward_impl.1} parent=0 // loop_exit
    _

</llo_original>
